<compile_context>
chip_gen: v7x
topology: tpu7x:2x2x1
jax: 0.10.0
libtpu: 0.0.40
codegen_flags: <defaults>
</compile_context>

<pallas_src>
import sys

import jax
import jax.numpy as jnp
from jax.experimental import pallas as pl
from jax.experimental.pallas import tpu as pltpu

EPS = float(sys.float_info.epsilon)   # 2.220446049250313e-16, Python literal
LANE = 128
SUB = 8
CHUNK = SUB * LANE                     # 1024 f32 elements per (8,128) vreg
MAX_BLOCK_CHUNKS = 512                 # 512 * 4 KiB = 2 MiB per input block


def _kld_fused_kernel(inp_ref, trg_ref, out_ref,
                      acc_si, acc_st, acc_kl, prm_ref):
    """grid = (phase, block).  phase 0: sums.  phase 1: KL terms."""
    phase = pl.program_id(0)
    i = pl.program_id(1)
    last = pl.num_programs(1) - 1

    # ---------------- phase 0: element-wise partial sums (pure VALU) -------
    @pl.when((phase == 0) & (i == 0))
    def _():
        acc_si[...] = jnp.zeros_like(acc_si)
        acc_st[...] = jnp.zeros_like(acc_st)

    @pl.when(phase == 0)
    def _():
        # Fold the (C, 8, 128) tile into one vreg: leading-axis sum is just
        # C-1 vector adds, no XLU work, one tiny accumulator store per step.
        acc_si[...] += jnp.sum(inp_ref[...], axis=0)
        acc_st[...] += jnp.sum(trg_ref[...], axis=0)

    # -------- phase 1 prologue: one cross-lane reduce + scalars, once ------
    @pl.when((phase == 1) & (i == 0))
    def _():
        si = jnp.sum(acc_si[...])
        st = jnp.sum(acc_st[...])
        prm_ref[0] = 1.0 / st          # 1 / sum(trg)
        prm_ref[1] = si / st           # sum(inp) / sum(trg)
        prm_ref[2] = EPS * si          # eps * sum(inp)
        acc_kl[...] = jnp.zeros_like(acc_kl)

    # ---------------- phase 1: element-wise KL accumulation ----------------
    @pl.when(phase == 1)
    def _():
        inv_st = prm_ref[0]
        c = prm_ref[1]
        e2 = prm_ref[2]
        t = trg_ref[...]
        x = inp_ref[...]
        # == (trg/St) * log(eps + (trg/St) / (inp/Si + eps)), folded form.
        kl = (t * inv_st) * jnp.log(EPS + (t * c) / (x + e2))
        acc_kl[...] += jnp.sum(kl, axis=0)

    # -------- epilogue: single final reduce, single scalar store -----------
    @pl.when((phase == 1) & (i == last))
    def _():
        out_ref[...] = jnp.sum(acc_kl[...], keepdims=True)


@jax.jit
def kld_loss(inp, trg):
    """JAX/Pallas equivalent of KLDLoss.forward(inp, trg). Returns a scalar."""
    n = inp.size
    chunks = -(-n // CHUNK)                          # ceil(n / 1024)
    block_chunks = min(chunks, MAX_BLOCK_CHUNKS)
    num_blocks = -(-chunks // block_chunks)
    padded_chunks = num_blocks * block_chunks
    padded_n = padded_chunks * CHUNK

    def to_tiles(x):
        x = x.reshape(-1).astype(jnp.float32)
        if padded_n != n:
            # Exact: zero pads add 0 to both sums and 0*log(eps) == 0 to KL.
            x = jnp.pad(x, (0, padded_n - n))
        return x.reshape(padded_chunks, SUB, LANE)

    xi = to_tiles(inp)
    xt = to_tiles(trg)

    tile_spec = pl.BlockSpec((block_chunks, SUB, LANE), lambda ph, i: (i, 0, 0))

    out = pl.pallas_call(
        _kld_fused_kernel,
        out_shape=jax.ShapeDtypeStruct((1, 1), jnp.float32),
        grid=(2, num_blocks),                        # (phase, tile)
        in_specs=[tile_spec, tile_spec],
        out_specs=pl.BlockSpec((1, 1), lambda ph, i: (0, 0)),
        scratch_shapes=[
            pltpu.VMEM((SUB, LANE), jnp.float32),    # acc: sum(inp) partials
            pltpu.VMEM((SUB, LANE), jnp.float32),    # acc: sum(trg) partials
            pltpu.VMEM((SUB, LANE), jnp.float32),    # acc: KL-term partials
            pltpu.SMEM((3,), jnp.float32),           # [1/St, Si/St, eps*Si]
        ],
        compiler_params=pltpu.CompilerParams(
            # Scratch accumulators carry state across grid steps -> must stay
            # sequential ("arbitrary"); see v7x TODO at top of file.
            dimension_semantics=("arbitrary", "arbitrary"),
        ),
        cost_estimate=pl.CostEstimate(
            flops=8 * n, transcendentals=2 * n, bytes_accessed=16 * n),
    )(xi, xt)

    return out[0, 0]


def _kld_loss_ref(inp, trg):
    """Pure-JAX reference matching the PyTorch module."""
    inp = inp.astype(jnp.float32)
    trg = trg.astype(jnp.float32)
    inp = inp / jnp.sum(inp)
    trg = trg / jnp.sum(trg)
    return jnp.sum(trg * jnp.log(EPS + trg / (inp + EPS)))


if __name__ == "__main__":
    key = jax.random.PRNGKey(0)
    k1, k2 = jax.random.split(key)
    # Saliency-map-like positive inputs, NCHW.
    inp = jax.random.uniform(k1, (2, 4, 16, 16), dtype=jnp.float32) + 1e-3
    trg = jax.random.uniform(k2, (2, 4, 16, 16), dtype=jnp.float32) + 1e-3

    out = jax.block_until_ready(kld_loss(inp, trg))
    ref = _kld_loss_ref(inp, trg)
    assert jnp.allclose(out, ref, rtol=1e-4, atol=1e-5), (out, ref)

    print("KERNEL_OK")
</pallas_src>

<mosaic_0001>
module attributes {stable_mosaic.version = 11 : i64} {
  func.func @_kld_fused_kernel(%arg0: i32, %arg1: i32, %arg2: memref<2x8x128xf32, #tpu.memory_space<vmem>>, %arg3: memref<2x8x128xf32, #tpu.memory_space<vmem>>, %arg4: memref<1x1xf32, #tpu.memory_space<vmem>>, %arg5: memref<8x128xf32, #tpu.memory_space<vmem>>, %arg6: memref<8x128xf32, #tpu.memory_space<vmem>>, %arg7: memref<8x128xf32, #tpu.memory_space<vmem>>, %arg8: memref<3xf32, #tpu.memory_space<smem>>) attributes {dimension_semantics = [#tpu.dimension_semantics<arbitrary>, #tpu.dimension_semantics<arbitrary>], iteration_bounds = array<i64: 2, 1>, scalar_prefetch = 0 : i64, scratch_operands = 4 : i64, tpu.core_type = #tpu.core_type<tc>, window_params = [{transform_indices = @transform_0, window_bounds = array<i64: 2, 8, 128>}, {transform_indices = @transform_1, window_bounds = array<i64: 2, 8, 128>}, {pipeline_mode = #tpu.pipeline_mode<synchronous>, transform_indices = @transform_2, window_bounds = array<i64: 1, 1>}]} {
    %c0_i32 = arith.constant 0 : i32
    %0 = arith.cmpi eq, %arg0, %c0_i32 : i32
    %c0_i32_0 = arith.constant 0 : i32
    %1 = arith.cmpi eq, %arg1, %c0_i32_0 : i32
    %2 = arith.andi %0, %1 : i1
    %3 = arith.extui %2 : i1 to i32
    %c0_i32_1 = arith.constant 0 : i32
    %4 = arith.cmpi ne, %3, %c0_i32_1 : i32
    scf.if %4 {
      %cst = arith.constant 0.000000e+00 : f32
      %21 = vector.broadcast %cst : f32 to vector<8x128xf32>
      %c0 = arith.constant 0 : index
      %c0_11 = arith.constant 0 : index
      %22 = vector.load %arg5[%c0, %c0_11] : memref<8x128xf32, #tpu.memory_space<vmem>>, vector<8x128xf32>
      tpu.vector_store %arg5[%c0, %c0_11], %21 {strides = array<i32>} : memref<8x128xf32, #tpu.memory_space<vmem>>, vector<8x128xf32>,
      %cst_12 = arith.constant 0.000000e+00 : f32
      %23 = vector.broadcast %cst_12 : f32 to vector<8x128xf32>
      %c0_13 = arith.constant 0 : index
      %c0_14 = arith.constant 0 : index
      %24 = vector.load %arg6[%c0_13, %c0_14] : memref<8x128xf32, #tpu.memory_space<vmem>>, vector<8x128xf32>
      tpu.vector_store %arg6[%c0_13, %c0_14], %23 {strides = array<i32>} : memref<8x128xf32, #tpu.memory_space<vmem>>, vector<8x128xf32>,
    } else {
    }
    %c0_i32_2 = arith.constant 0 : i32
    %5 = arith.cmpi eq, %arg0, %c0_i32_2 : i32
    %6 = arith.extui %5 : i1 to i32
    %c0_i32_3 = arith.constant 0 : i32
    %7 = arith.cmpi ne, %6, %c0_i32_3 : i32
    scf.if %7 {
      %c0 = arith.constant 0 : index
      %c0_11 = arith.constant 0 : index
      %21 = vector.load %arg5[%c0, %c0_11] : memref<8x128xf32, #tpu.memory_space<vmem>>, vector<8x128xf32>
      %c0_12 = arith.constant 0 : index
      %c0_13 = arith.constant 0 : index
      %c0_14 = arith.constant 0 : index
      %22 = vector.load %arg2[%c0_12, %c0_13, %c0_14] : memref<2x8x128xf32, #tpu.memory_space<vmem>>, vector<2x8x128xf32>
      %cst = arith.constant dense<0.000000e+00> : vector<8x128xf32>
      %23 = vector.multi_reduction <add>, %22, %cst [0] : vector<2x8x128xf32> to vector<8x128xf32>
      %24 = arith.addf %21, %23 : vector<8x128xf32>
      %c0_15 = arith.constant 0 : index
      %c0_16 = arith.constant 0 : index
      %25 = vector.load %arg5[%c0_15, %c0_16] : memref<8x128xf32, #tpu.memory_space<vmem>>, vector<8x128xf32>
      tpu.vector_store %arg5[%c0_15, %c0_16], %24 {strides = array<i32>} : memref<8x128xf32, #tpu.memory_space<vmem>>, vector<8x128xf32>,
      %c0_17 = arith.constant 0 : index
      %c0_18 = arith.constant 0 : index
      %26 = vector.load %arg6[%c0_17, %c0_18] : memref<8x128xf32, #tpu.memory_space<vmem>>, vector<8x128xf32>
      %c0_19 = arith.constant 0 : index
      %c0_20 = arith.constant 0 : index
      %c0_21 = arith.constant 0 : index
      %27 = vector.load %arg3[%c0_19, %c0_20, %c0_21] : memref<2x8x128xf32, #tpu.memory_space<vmem>>, vector<2x8x128xf32>
      %cst_22 = arith.constant dense<0.000000e+00> : vector<8x128xf32>
      %28 = vector.multi_reduction <add>, %27, %cst_22 [0] : vector<2x8x128xf32> to vector<8x128xf32>
      %29 = arith.addf %26, %28 : vector<8x128xf32>
      %c0_23 = arith.constant 0 : index
      %c0_24 = arith.constant 0 : index
      %30 = vector.load %arg6[%c0_23, %c0_24] : memref<8x128xf32, #tpu.memory_space<vmem>>, vector<8x128xf32>
      tpu.vector_store %arg6[%c0_23, %c0_24], %29 {strides = array<i32>} : memref<8x128xf32, #tpu.memory_space<vmem>>, vector<8x128xf32>,
    } else {
    }
    %c1_i32 = arith.constant 1 : i32
    %8 = arith.cmpi eq, %arg0, %c1_i32 : i32
    %c0_i32_4 = arith.constant 0 : i32
    %9 = arith.cmpi eq, %arg1, %c0_i32_4 : i32
    %10 = arith.andi %8, %9 : i1
    %11 = arith.extui %10 : i1 to i32
    %c0_i32_5 = arith.constant 0 : i32
    %12 = arith.cmpi ne, %11, %c0_i32_5 : i32
    scf.if %12 {
      %c0 = arith.constant 0 : index
      %c0_11 = arith.constant 0 : index
      %21 = vector.load %arg5[%c0, %c0_11] : memref<8x128xf32, #tpu.memory_space<vmem>>, vector<8x128xf32>
      %22 = vector.shape_cast %21 : vector<8x128xf32> to vector<1x8x128xf32>
      %cst = arith.constant dense<0.000000e+00> : vector<1xf32>
      %23 = vector.multi_reduction <add>, %22, %cst [1, 2] : vector<1x8x128xf32> to vector<1xf32>
      %24 = vector.shape_cast %23 : vector<1xf32> to vector<1x1x1xf32>
      %25 = vector.extract %24[0, 0, 0] : f32 from vector<1x1x1xf32>
      %c0_12 = arith.constant 0 : index
      %c0_13 = arith.constant 0 : index
      %26 = vector.load %arg6[%c0_12, %c0_13] : memref<8x128xf32, #tpu.memory_space<vmem>>, vector<8x128xf32>
      %27 = vector.shape_cast %26 : vector<8x128xf32> to vector<1x8x128xf32>
      %cst_14 = arith.constant dense<0.000000e+00> : vector<1xf32>
      %28 = vector.multi_reduction <add>, %27, %cst_14 [1, 2] : vector<1x8x128xf32> to vector<1xf32>
      %29 = vector.shape_cast %28 : vector<1xf32> to vector<1x1x1xf32>
      %30 = vector.extract %29[0, 0, 0] : f32 from vector<1x1x1xf32>
      %cst_15 = arith.constant 1.000000e+00 : f32
      %31 = arith.divf %cst_15, %30 : f32
      %c0_16 = arith.constant 0 : index
      %32 = memref.load %arg8[%c0_16] : memref<3xf32, #tpu.memory_space<smem>>
      memref.store %31, %arg8[%c0_16] : memref<3xf32, #tpu.memory_space<smem>>
      %33 = arith.divf %25, %30 : f32
      %c1 = arith.constant 1 : index
      %34 = memref.load %arg8[%c1] : memref<3xf32, #tpu.memory_space<smem>>
      memref.store %33, %arg8[%c1] : memref<3xf32, #tpu.memory_space<smem>>
      %cst_17 = arith.constant 2.22044605E-16 : f32
      %35 = arith.mulf %cst_17, %25 : f32
      %c2 = arith.constant 2 : index
      %36 = memref.load %arg8[%c2] : memref<3xf32, #tpu.memory_space<smem>>
      memref.store %35, %arg8[%c2] : memref<3xf32, #tpu.memory_space<smem>>
      %cst_18 = arith.constant 0.000000e+00 : f32
      %37 = vector.broadcast %cst_18 : f32 to vector<8x128xf32>
      %c0_19 = arith.constant 0 : index
      %c0_20 = arith.constant 0 : index
      %38 = vector.load %arg7[%c0_19, %c0_20] : memref<8x128xf32, #tpu.memory_space<vmem>>, vector<8x128xf32>
      tpu.vector_store %arg7[%c0_19, %c0_20], %37 {strides = array<i32>} : memref<8x128xf32, #tpu.memory_space<vmem>>, vector<8x128xf32>,
    } else {
    }
    %c1_i32_6 = arith.constant 1 : i32
    %13 = arith.cmpi eq, %arg0, %c1_i32_6 : i32
    %14 = arith.extui %13 : i1 to i32
    %c0_i32_7 = arith.constant 0 : i32
    %15 = arith.cmpi ne, %14, %c0_i32_7 : i32
    scf.if %15 {
      %c0 = arith.constant 0 : index
      %21 = memref.load %arg8[%c0] : memref<3xf32, #tpu.memory_space<smem>>
      %c1 = arith.constant 1 : index
      %22 = memref.load %arg8[%c1] : memref<3xf32, #tpu.memory_space<smem>>
      %c2 = arith.constant 2 : index
      %23 = memref.load %arg8[%c2] : memref<3xf32, #tpu.memory_space<smem>>
      %c0_11 = arith.constant 0 : index
      %c0_12 = arith.constant 0 : index
      %c0_13 = arith.constant 0 : index
      %24 = vector.load %arg3[%c0_11, %c0_12, %c0_13] : memref<2x8x128xf32, #tpu.memory_space<vmem>>, vector<2x8x128xf32>
      %c0_14 = arith.constant 0 : index
      %c0_15 = arith.constant 0 : index
      %c0_16 = arith.constant 0 : index
      %25 = vector.load %arg2[%c0_14, %c0_15, %c0_16] : memref<2x8x128xf32, #tpu.memory_space<vmem>>, vector<2x8x128xf32>
      %26 = vector.broadcast %21 : f32 to vector<2x8x128xf32>
      %27 = arith.mulf %24, %26 : vector<2x8x128xf32>
      %28 = vector.broadcast %22 : f32 to vector<2x8x128xf32>
      %29 = arith.mulf %24, %28 : vector<2x8x128xf32>
      %30 = vector.broadcast %23 : f32 to vector<2x8x128xf32>
      %31 = arith.addf %25, %30 : vector<2x8x128xf32>
      %32 = arith.divf %29, %31 : vector<2x8x128xf32>
      %cst = arith.constant 2.22044605E-16 : f32
      %33 = vector.broadcast %cst : f32 to vector<2x8x128xf32>
      %34 = arith.addf %33, %32 : vector<2x8x128xf32>
      %35 = math.log %34 : vector<2x8x128xf32>
      %36 = arith.mulf %27, %35 : vector<2x8x128xf32>
      %c0_17 = arith.constant 0 : index
      %c0_18 = arith.constant 0 : index
      %37 = vector.load %arg7[%c0_17, %c0_18] : memref<8x128xf32, #tpu.memory_space<vmem>>, vector<8x128xf32>
      %cst_19 = arith.constant dense<0.000000e+00> : vector<8x128xf32>
      %38 = vector.multi_reduction <add>, %36, %cst_19 [0] : vector<2x8x128xf32> to vector<8x128xf32>
      %39 = arith.addf %37, %38 : vector<8x128xf32>
      %c0_20 = arith.constant 0 : index
      %c0_21 = arith.constant 0 : index
      %40 = vector.load %arg7[%c0_20, %c0_21] : memref<8x128xf32, #tpu.memory_space<vmem>>, vector<8x128xf32>
      tpu.vector_store %arg7[%c0_20, %c0_21], %39 {strides = array<i32>} : memref<8x128xf32, #tpu.memory_space<vmem>>, vector<8x128xf32>,
    } else {
    }
    %c1_i32_8 = arith.constant 1 : i32
    %16 = arith.cmpi eq, %arg0, %c1_i32_8 : i32
    %c0_i32_9 = arith.constant 0 : i32
    %17 = arith.cmpi eq, %arg1, %c0_i32_9 : i32
    %18 = arith.andi %16, %17 : i1
    %19 = arith.extui %18 : i1 to i32
    %c0_i32_10 = arith.constant 0 : i32
    %20 = arith.cmpi ne, %19, %c0_i32_10 : i32
    scf.if %20 {
      %c0 = arith.constant 0 : index
      %c0_11 = arith.constant 0 : index
      %21 = vector.load %arg7[%c0, %c0_11] : memref<8x128xf32, #tpu.memory_space<vmem>>, vector<8x128xf32>
      %22 = vector.shape_cast %21 : vector<8x128xf32> to vector<1x8x128xf32>
      %cst = arith.constant dense<0.000000e+00> : vector<1xf32>
      %23 = vector.multi_reduction <add>, %22, %cst [1, 2] : vector<1x8x128xf32> to vector<1xf32>
      %24 = vector.shape_cast %23 : vector<1xf32> to vector<1x1x1xf32>
      %25 = vector.extract %24[0, 0, 0] : f32 from vector<1x1x1xf32>
      %26 = vector.broadcast %25 : f32 to vector<1x1xf32>
      %c0_12 = arith.constant 0 : index
      %c0_13 = arith.constant 0 : index
      %27 = vector.load %arg4[%c0_12, %c0_13] : memref<1x1xf32, #tpu.memory_space<vmem>>, vector<1x1xf32>
      tpu.vector_store %arg4[%c0_12, %c0_13], %26 {strides = array<i32>} : memref<1x1xf32, #tpu.memory_space<vmem>>, vector<1x1xf32>,
    } else {
    }
    return
  }
  func.func @transform_0(%arg0: i32, %arg1: i32) -> (i32, i32, i32) {
    %c0_i32 = arith.constant 0 : i32
    %c0_i32_0 = arith.constant 0 : i32
    %c0_i32_1 = arith.constant 0 : i32
    return %arg1, %c0_i32, %c0_i32_0 : i32, i32, i32
  }
  func.func @transform_1(%arg0: i32, %arg1: i32) -> (i32, i32, i32) {
    %c0_i32 = arith.constant 0 : i32
    %c0_i32_0 = arith.constant 0 : i32
    %c0_i32_1 = arith.constant 0 : i32
    return %arg1, %c0_i32, %c0_i32_0 : i32, i32, i32
  }
  func.func @transform_2(%arg0: i32, %arg1: i32) -> (i32, i32) {
    %c0_i32 = arith.constant 0 : i32
    %c0_i32_0 = arith.constant 0 : i32
    %c0_i32_1 = arith.constant 0 : i32
    return %c0_i32, %c0_i32_0 : i32, i32
  }
}

</mosaic_0001>

<llo_original>
// kernel: kld_loss.1
$region0: #{kld_loss.1}
  #allocation0 [shape = 'u32[]', space=smem, size = 0x4, offset = 0x4, fixed_abs, tag = 'smem constant byte address 0x4 - core index']
  #allocation1 [shape = 'u32[144,128]{1,0:T(1,128)}', space=vmem, size = 0x12000, scoped, tag = 'internal scratch']
  #allocation2 [shape = 'f32[8,128]{1,0:T(8,128)}', space=vmem, size = 0x1000, scoped, tag = 'scratch operand']
  #allocation3 [shape = 'f32[8,128]{1,0:T(8,128)}', space=vmem, size = 0x1000, scoped, tag = 'scratch operand']
  #allocation4 [shape = 'f32[8,128]{1,0:T(8,128)}', space=vmem, size = 0x1000, scoped, tag = 'scratch operand']
  #allocation5 [shape = 'f32[3]{0:T(128)}', space=smem, size = 0x200, scoped, tag = 'scratch operand']
  %s0 = inlined_call_operand.vmem [shape: f32[2,8,128], index: 0, kind: input, shape index: {}]
  %s1 = inlined_call_operand.vmem [shape: f32[2,8,128], index: 1, kind: input, shape index: {}]
  %s2 = inlined_call_operand.hbm [shape: f32[1,1], index: 2, kind: output, shape index: {}]
  %s3 = sld [smem:[#allocation0]]
  $region61: #{kld_loss.1} parent=0
    _
  %s5 = ssub.s32 1, %s3
  %s6 = scalar_select 0, %s5, %s3
  $region1: #{kld_loss.1} parent=0
    #allocation6 [shape = 'u8[512]{0}', space=vmem, size = 0x400, scoped, tag = 'output window, operand 0, single buffered']
    #allocation7 [shape = 's32[2]{0}', space=sflag, size = 0x8, scoped, tag = 'scoped memory for kld_loss.1']
    %7 = vsyncpa [#allocation7], 0
    loop: start=0, step=1, limit=4
    $region2: #{kld_loss.1} parent=1 // loop_pre_header
      _
    $region3: #{kld_loss.1} parent=1 // loop_header
      %s9 = sphi 0, %s13
      %p10 = scmp.ge.s32.totalorder %s9, 4
      %s16 = sphi 0, %s28
      %s17 = sphi 0, %s24
      %s18 = sphi 0, %s16
      %s19 = sphi 0, %s17
      %s20 = sphi 0, %s18
      %s21 = sphi 0, %s19
      %s31 = sphi 0, %s33
      %s34 = sphi 0, %s31
      %s35 = sphi 0, %s34
      %s51 = sphi 0, %s35
      %s57 = sphi 0, %s59
      %s60 = sphi 0, %s57
      %s61 = sphi 0, %s60
      %s77 = sphi 0, %s61
      %s81 = sphi 0, %s81
      %s83 = sphi 0, %s81
      %s84 = sphi 0, %s83
      %s98 = sphi 0, %s84
    $region4: #{kld_loss.1} parent=1 // loop_header_branch
      %12 = sbr.rel (%p10) target = $region8
    $region5: #{kld_loss.1} parent=1 // loop_body
      %s14 = ssub.s32 %s9, 1
      %s15 = ssub.s32 %s9, 2
      %s22 = sadd.s32 1, %s17
      %p23 = scmp.ge.s32.totalorder %s22, 1
      %s24 = scalar_select %p23, 0, %s22
      %s25 = sadd.s32 1, %s16
      %s26 = scalar_select %p23, %s25, %s16
      %p27 = scmp.ge.s32.totalorder %s26, 2
      %s28 = scalar_select %p27, 0, %s26
      %s29 = ssub.s32 %s17, %s24
      %p30 = scmp.eq.s32.totalorder %s29, 0
      %s32 = sadd.s32 %s31, 1
      %s33 = scalar_select %p30, %s31, %s32
      %p36 = pneg %p30
      %p37 = scmp.eq.s32.totalorder %s9, 1
      %p38 = por %p36, %p37
      %p39 = scmp.ne.s32.totalorder %s31, %s34
      %p40 = scmp.eq.s32.totalorder %s9, 0
      %p41 = por %p39, %p40
      %p42 = scmp.ne.s32.totalorder %s31, %s34
      %p43 = scmp.eq.s32.totalorder %s14, 1
      %p44 = por %p42, %p43
      %p45 = scmp.ne.s32.totalorder %s34, %s35
      %p46 = scmp.eq.s32.totalorder %s14, 0
      %p47 = por %p45, %p46
      %p48 = scmp.ne.s32.totalorder %s34, %s35
      %p49 = scmp.eq.s32.totalorder %s15, 1
      %p50 = por %p48, %p49
      %p52 = scmp.ne.s32.totalorder %s35, %s51
      %p53 = scmp.eq.s32.totalorder %s15, 0
      %p54 = por %p52, %p53
      %s55 = ssub.s32 %s17, %s24
      %p56 = scmp.eq.s32.totalorder %s55, 0
      %s58 = sadd.s32 %s57, 1
      %s59 = scalar_select %p56, %s57, %s58
      %p62 = pneg %p56
      %p63 = scmp.eq.s32.totalorder %s9, 1
      %p64 = por %p62, %p63
      %p65 = scmp.ne.s32.totalorder %s57, %s60
      %p66 = scmp.eq.s32.totalorder %s9, 0
      %p67 = por %p65, %p66
      %p68 = scmp.ne.s32.totalorder %s57, %s60
      %p69 = scmp.eq.s32.totalorder %s14, 1
      %p70 = por %p68, %p69
      %p71 = scmp.ne.s32.totalorder %s60, %s61
      %p72 = scmp.eq.s32.totalorder %s14, 0
      %p73 = por %p71, %p72
      %p74 = scmp.ne.s32.totalorder %s60, %s61
      %p75 = scmp.eq.s32.totalorder %s15, 1
      %p76 = por %p74, %p75
      %p78 = scmp.ne.s32.totalorder %s61, %s77
      %p79 = scmp.eq.s32.totalorder %s15, 0
      %p80 = por %p78, %p79
      %s82 = sadd.s32 %s81, 1
      %p85 = scmp.eq.s32.totalorder %s9, 1
      %p86 = scmp.ne.s32.totalorder %s81, %s83
      %p87 = scmp.eq.s32.totalorder %s9, 0
      %p88 = por %p86, %p87
      %p89 = scmp.ne.s32.totalorder %s81, %s83
      %p90 = scmp.eq.s32.totalorder %s14, 1
      %p91 = por %p89, %p90
      %p92 = scmp.ne.s32.totalorder %s83, %s84
      %p93 = scmp.eq.s32.totalorder %s14, 0
      %p94 = por %p92, %p93
      %p95 = scmp.ne.s32.totalorder %s83, %s84
      %p96 = scmp.eq.s32.totalorder %s15, 1
      %p97 = por %p95, %p96
      %p99 = scmp.ne.s32.totalorder %s84, %s98
      %p100 = scmp.eq.s32.totalorder %s15, 0
      %p101 = por %p99, %p100
      %p102 = scmp.le.s32.totalorder 1, %s9
      %p103 = scmp.lt.s32.totalorder %s9, 3
      %p104 = pnand %p102, %p103
      %p105 = pneg %p104
      // Predicated region
      $region9: #{kld_loss.1} parent=5 // pred_check
        _
      $region10: #{kld_loss.1} parent=5 // pred_check_branch
        %107 = sbr.rel (%p104) target = $region12
      $region11: #{kld_loss.1} parent=5 // pred_region
        %s108 = ssub.s32 %s9, 1
        // Predicated region
        $region13: #{kld_loss.1} parent=11 // pred_check
          %p109 = pneg %p47
        $region14: #{kld_loss.1} parent=11 // pred_check_branch
          %111 = sbr.rel (%p109) target = $region16
        $region15: #{kld_loss.1} parent=11 // pred_region
          %s112 = smul.u32 2, %s19
          %p113 = scmp.lt.s32.totalorder %s112, 1
          %s114 = scalar_select %p113, %s112, 1
          %s115 = smul.addr %s114, 8
          %s116 = scalar_lea.vmem %s0, %s115
          %s117 = smul.u32 2, %s19
        $region16: #{kld_loss.1} parent=11 // pred_fallthru
          _
        // Predicated region
        $region17: #{kld_loss.1} parent=11 // pred_check
          %p118 = pneg %p73
        $region18: #{kld_loss.1} parent=11 // pred_check_branch
          %120 = sbr.rel (%p118) target = $region20
        $region19: #{kld_loss.1} parent=11 // pred_region
          %s121 = smul.u32 2, %s19
          %p122 = scmp.lt.s32.totalorder %s121, 1
          %s123 = scalar_select %p122, %s121, 1
          %s124 = smul.addr %s123, 8
          %s125 = scalar_lea.vmem %s1, %s124
          %s126 = smul.u32 2, %s19
        $region20: #{kld_loss.1} parent=11 // pred_fallthru
          _
      $region12: #{kld_loss.1} parent=5 // pred_fallthru
        _
      %p127 = scmp.lt.s32.totalorder %s9, 2
      // Predicated region
      $region21: #{kld_loss.1} parent=5 // pred_check
        %p128 = pneg %p127
      $region22: #{kld_loss.1} parent=5 // pred_check_branch
        %130 = sbr.rel (%p128) target = $region24
      $region23: #{kld_loss.1} parent=5 // pred_region
        _
      $region24: #{kld_loss.1} parent=5 // pred_fallthru
        _
      %p131 = scmp.le.s32.totalorder 1, %s9
      %p132 = scmp.lt.s32.totalorder %s9, 3
      %p133 = pnand %p131, %p132
      %p134 = pneg %p133
      // Predicated region
      $region25: #{kld_loss.1} parent=5 // pred_check
        _
      $region26: #{kld_loss.1} parent=5 // pred_check_branch
        %136 = sbr.rel (%p133) target = $region28
      $region27: #{kld_loss.1} parent=5 // pred_region
        %s137 = ssub.s32 %s9, 1
        %s138 = smul.u32 2, %s19
        %p139 = scmp.lt.s32.totalorder %s138, 1
        %s140 = scalar_select %p139, %s138, 1
        %s141 = smul.addr %s140, 8
        %s142 = scalar_lea.vmem %s0, %s141
        %p143 = pneg %p47
        %p144 = pneg %p44
        %s145 = smul.u32 2, %s19
        %p146 = scmp.lt.s32.totalorder %s145, 1
        %s147 = scalar_select %p146, %s145, 1
        %s148 = smul.addr %s147, 8
        %s149 = scalar_lea.vmem %s1, %s148
        %p150 = pneg %p73
        %p151 = pneg %p70
        %p152 = pneg %p94
        %p153 = pneg %p91
        %s154 = smul.u32 2, %s19
        %p155 = scmp.lt.s32.totalorder %s154, 1
        %s156 = scalar_select %p155, %s154, 1
        %s157 = smul.addr %s156, 8
        %s158 = scalar_lea.vmem %s0, %s157
        %s159 = smul.u32 2, %s19
        %s160 = smul.u32 2, %s19
        %p161 = scmp.lt.s32.totalorder %s160, 1
        %s162 = scalar_select %p161, %s160, 1
        %s163 = smul.addr %s162, 8
        %s164 = scalar_lea.vmem %s1, %s163
        %s165 = smul.u32 2, %s19
        %p166 = scmp.eq.s32.totalorder %s18, 0
        %p167 = scmp.eq.s32.totalorder %s19, 0
        %p168 = pnand %p166, %p167
        %p169 = pneg %p168
        // Predicated region
        $region29: #{kld_loss.1} parent=27 // pred_check
          _
        $region30: #{kld_loss.1} parent=27 // pred_check_branch
          %171 = sbr.rel (%p168) target = $region32
        $region31: #{kld_loss.1} parent=27 // pred_region
          %172 = vst [vmem:[#allocation2] sm:$0xff] 0.0
          %173 = vst [vmem:[#allocation3] sm:$0xff] 0.0
        $region32: #{kld_loss.1} parent=27 // pred_fallthru
          _
        // Predicated region
        $region33: #{kld_loss.1} parent=27 // pred_check
          %p174 = pneg %p166
        $region34: #{kld_loss.1} parent=27 // pred_check_branch
          %176 = sbr.rel (%p174) target = $region36
        $region35: #{kld_loss.1} parent=27 // pred_region
          %v177 = vld [vmem:[#allocation2] sm:$0xff]
          %v178 = vld [vmem:[%s158] sm:$0xff]
          %v179 = vld [vmem:[%s158 + $0x8] sm:$0xff]
          %v180 = vadd.f32 %v178, %v179
          %v181 = vadd.f32 %v177, %v180
          %182 = vst [vmem:[#allocation2] sm:$0xff] %v181
          %v183 = vld [vmem:[#allocation3] sm:$0xff]
          %v184 = vld [vmem:[%s164] sm:$0xff]
          %v185 = vld [vmem:[%s164 + $0x8] sm:$0xff]
          %v186 = vadd.f32 %v184, %v185
          %v187 = vadd.f32 %v183, %v186
          %188 = vst [vmem:[#allocation3] sm:$0xff] %v187
        $region36: #{kld_loss.1} parent=27 // pred_fallthru
          _
        %p189 = scmp.eq.s32.totalorder %s18, 1
        %p190 = pnand %p189, %p167
        %p191 = pneg %p190
        // Predicated region
        $region37: #{kld_loss.1} parent=27 // pred_check
          _
        $region38: #{kld_loss.1} parent=27 // pred_check_branch
          %193 = sbr.rel (%p190) target = $region40
        $region39: #{kld_loss.1} parent=27 // pred_region
          %v194 = vld [vmem:[#allocation2] sm:$0xff]
          %195 = vadd.xlane.f32.xlu0 %v194
          %v196 = vpop.xlane.xlu0 %195
          %v197 = vrot.slane %v196, 4
          %v198 = vadd.f32 %v196, %v197
          %v199 = vrot.slane %v198, 2
          %v200 = vadd.f32 %v198, %v199
          %v201 = vrot.slane %v200, 1
          %v202 = vadd.f32 %v200, %v201
          %s203 = vtos %v202
          %v204 = vld [vmem:[#allocation3] sm:$0xff]
          %205 = vadd.xlane.f32.xlu0 %v204
          %v206 = vpop.xlane.xlu0 %205
          %v207 = vrot.slane %v206, 4
          %v208 = vadd.f32 %v206, %v207
          %v209 = vrot.slane %v208, 2
          %v210 = vadd.f32 %v208, %v209
          %v211 = vrot.slane %v210, 1
          %v212 = vadd.f32 %v210, %v211
          %s213 = vtos %v212
          %v214 = vstv %s213
          %v215 = vrcp.pop %v214
          %s216 = vtos %v215
          %s217 = scalar_lea.smem [#allocation5], 0
          %218 = sst [smem:[%s217]] %s216
          %v219 = vstv %s213
          %v220 = vrcp.pop %v219
          %s221 = vtos %v220
          %s222 = smul.f32 %s203, %s221
          %s223 = scalar_lea.smem [#allocation5], 1
          %224 = sst [smem:[%s223]] %s222
          %s225 = smul.f32 %s203, 2.220446e-16
          %s226 = scalar_lea.smem [#allocation5], 2
          %227 = sst [smem:[%s226]] %s225
          %228 = vst [vmem:[#allocation4] sm:$0xff] 0.0
        $region40: #{kld_loss.1} parent=27 // pred_fallthru
          _
        // Predicated region
        $region41: #{kld_loss.1} parent=27 // pred_check
          %p229 = pneg %p189
        $region42: #{kld_loss.1} parent=27 // pred_check_branch
          %231 = sbr.rel (%p229) target = $region44
        $region43: #{kld_loss.1} parent=27 // pred_region
          %s232 = sld [smem:[#allocation5]]
          %s233 = sld [smem:[#allocation5 + $0x1]]
          %s234 = sld [smem:[#allocation5 + $0x2]]
          %v235 = vld [vmem:[%s164] sm:$0xff]
          %v236 = vld [vmem:[%s164 + $0x8] sm:$0xff]
          %v237 = vld [vmem:[%s158] sm:$0xff]
          %v238 = vld [vmem:[%s158 + $0x8] sm:$0xff]
          %v239 = vstv %s232
          %v240 = vmul.f32 %v235, %v239
          %v241 = vmul.f32 %v236, %v239
          %v242 = vstv %s233
          %v243 = vmul.f32 %v235, %v242
          %v244 = vmul.f32 %v236, %v242
          %v245 = vstv %s234
          %v246 = vadd.f32 %v237, %v245
          %v247 = vadd.f32 %v238, %v245
          %v248 = vrcp.pop %v246
          %v249 = vmul.f32 %v243, %v248
          %v250 = vrcp.pop %v247
          %v251 = vmul.f32 %v244, %v250
          %v252 = vadd.f32 %v249, 2.220446e-16
          %v253 = vadd.f32 %v251, 2.220446e-16
          %v254 = vlog2.pop %v252
          %v255 = vmul.f32 %v254, 0.6931472
          %v256 = vlog2.pop %v253
          %v257 = vmul.f32 %v256, 0.6931472
          %v258 = vmul.f32 %v240, %v255
          %v259 = vmul.f32 %v241, %v257
          %v260 = vld [vmem:[#allocation4] sm:$0xff]
          %v261 = vadd.f32 %v258, %v259
          %v262 = vadd.f32 %v260, %v261
          %263 = vst [vmem:[#allocation4] sm:$0xff] %v262
        $region44: #{kld_loss.1} parent=27 // pred_fallthru
          _
        // Predicated region
        $region45: #{kld_loss.1} parent=27 // pred_check
          _
        $region46: #{kld_loss.1} parent=27 // pred_check_branch
          %265 = sbr.rel (%p190) target = $region48
        $region47: #{kld_loss.1} parent=27 // pred_region
          %v266 = vld [vmem:[#allocation4] sm:$0xff]
          %267 = vadd.xlane.f32.xlu0 %v266
          %v268 = vpop.xlane.xlu0 %267
          %v269 = vrot.slane %v268, 4
          %v270 = vadd.f32 %v268, %v269
          %v271 = vrot.slane %v270, 2
          %v272 = vadd.f32 %v270, %v271
          %v273 = vrot.slane %v272, 1
          %v274 = vadd.f32 %v272, %v273
          %s275 = vtos %v274
          %v276 = vstv %s275
          %vm277 = vcmask 0
          %278 = vst.msk [vmem:[#allocation6] sm:$0x1] %vm277, %v276
        $region48: #{kld_loss.1} parent=27 // pred_fallthru
          _
        // Predicated region
        $region49: #{kld_loss.1} parent=27 // pred_check
          %p279 = pneg %p91
        $region50: #{kld_loss.1} parent=27 // pred_check_branch
          %281 = sbr.rel (%p279) target = $region52
        $region51: #{kld_loss.1} parent=27 // pred_region
          %s283 = ssub.s32 16, 16
          %284 = vsyncadd [#allocation7], %s283
          %s286 = sshll.u32 [#allocation6], 4
          %s287 = int_to_ptr.vmem [resolvable:$true] %s286
          %289 = dma.vmem_to_hbm [thread:$0]  %s287, 16, %s2, [#allocation7]
        $region52: #{kld_loss.1} parent=27 // pred_fallthru
          _
        // Predicated region
        $region53: #{kld_loss.1} parent=27 // pred_check
          %p290 = pneg %p91
        $region54: #{kld_loss.1} parent=27 // pred_check_branch
          %292 = sbr.rel (%p290) target = $region56
        $region55: #{kld_loss.1} parent=27 // pred_region
          %293 = dma.done [#allocation7], 16
        $region56: #{kld_loss.1} parent=27 // pred_fallthru
          _
      $region28: #{kld_loss.1} parent=5 // pred_fallthru
        _
      %p294 = scmp.le.s32.totalorder 2, %s9
      // Predicated region
      $region57: #{kld_loss.1} parent=5 // pred_check
        %p295 = pneg %p294
      $region58: #{kld_loss.1} parent=5 // pred_check_branch
        %297 = sbr.rel (%p295) target = $region60
      $region59: #{kld_loss.1} parent=5 // pred_region
        %s298 = ssub.s32 %s9, 2
      $region60: #{kld_loss.1} parent=5 // pred_fallthru
        _
    $region6: #{kld_loss.1} parent=1 // loop_footer
      %s13 = sadd.s32 1, %s9
    $region7: #{kld_loss.1} parent=1 // loop_footer_branch
      %8 = sbr.rel target = $region3
    $region8: #{kld_loss.1} parent=1 // loop_exit
      _
    %299 = vsyncpa [#allocation7], 1
    %s300 = scalar_lea.sflag [#allocation7], 1
    %301 = vsyncpa %s300, 1

</llo_original>
